<compile_context>
chip_gen: v7x
topology: tpu7x:2x2x1
jax: 0.10.0
libtpu: 0.0.40
codegen_flags: <defaults>
</compile_context>

<pallas_src>
import functools

import jax
import jax.numpy as jnp
from jax.experimental import pallas as pl
from jax.experimental.pallas import tpu as pltpu


LANE = 128  # pad all minor (lane) dims to this


def _round_up(v, m):
    return (v + m - 1) // m * m


def _pad2d(a, rows, cols, dtype):
    return jnp.pad(a, ((0, rows - a.shape[0]), (0, cols - a.shape[1]))).astype(dtype)


def _tpu_budget():
    """(row_tile, vmem_limit_bytes) per TPU generation; fallback = v7x-safe."""
    try:
        vmem = pltpu.get_tpu_info().vmem_capacity_bytes
    except Exception:  # unknown / query unavailable -> most conservative part
        vmem = 64 * 1024 * 1024
    if vmem >= 96 * 1024 * 1024:          # v5e / v6e: 128 MiB physical VMEM
        return 512, 100 * 1024 * 1024
    return 256, 48 * 1024 * 1024          # v7x: 64 MiB physical VMEM


def _padded_dims(n_nodes, nhid):
    row_tile_budget, vmem_limit = _tpu_budget()
    hp = _round_up(nhid, LANE)
    row_tile = min(row_tile_budget, _round_up(n_nodes, LANE))
    np_ = _round_up(n_nodes, row_tile)
    return np_, hp, row_tile, vmem_limit


def preprocess_adj(adj, nhid):
    """Pad + bf16-cast the dense adjacency ONCE; reuse across forward calls.

    The pad/cast pre-pass costs ~6*Np^2 bytes of HBM traffic — comparable to
    the kernel itself — so it should not be repeated per call.
    """
    n = adj.shape[0]
    np_, _, _, _ = _padded_dims(n, nhid)
    return _pad2d(adj, np_, np_, jnp.bfloat16)


def _fused_gcn_kernel(s1_ref, adj_ref, w2_ref, bias_ref, out_ref, s2_ref,
                      *, adj_resident, row_tile):
    """One grid step = one (layer, row-tile) pair.

    Grid order is (0,0)..(0,nt-1),(1,0)..(1,nt-1) (last axis fastest), so the
    resident support2 scratch is fully populated by layer 0 before any layer-1
    step reads it.
    """
    layer = pl.program_id(0)
    i = pl.program_id(1)
    row0 = pl.multiple_of(i * row_tile, row_tile)

    if adj_resident:
        adj_tile = adj_ref[pl.ds(row0, row_tile), :]   # slice of the resident adj
    else:
        adj_tile = adj_ref[...]                        # streamed row tile

    bias = bias_ref[...]                               # (1, Hp) f32, per-layer block

    @pl.when(layer == 0)
    def _():
        # relu(adj_tile @ support1 + b1)  -> fused epilogue: @ W2 into support2.
        acc = jnp.dot(adj_tile, s1_ref[...], preferred_element_type=jnp.float32)
        act = jnp.maximum(acc + bias, 0.0)
        # TODO(synk): training-mode dropout would mask `act` with
        # pltpu.prng_random_bits here (identity in eval mode).
        s2 = jnp.dot(act.astype(w2_ref.dtype), w2_ref[...],
                     preferred_element_type=jnp.float32)
        s2_ref[pl.ds(row0, row_tile), :] = s2.astype(s2_ref.dtype)

    @pl.when(layer == 1)
    def _():
        # relu(adj_tile @ support2 + b2) -> final output tile (only HBM write).
        acc = jnp.dot(adj_tile, s2_ref[...], preferred_element_type=jnp.float32)
        out_ref[...] = jnp.maximum(acc + bias, 0.0).astype(out_ref.dtype)


def custom_gcn_forward(x, adj, params):
    """CustomGCN.forward: relu(adj @ (relu(adj @ (x@W1)+b1) @ W2) + b2).

    `adj` may be the raw (N, N) float adjacency or the pre-padded bf16
    (Np, Np) array returned by preprocess_adj() (cached across calls).
    """
    N, _ = x.shape
    H = params["w1"].shape[1]
    Np, Hp, row_tile, vmem_limit = _padded_dims(N, H)
    nt = Np // row_tile

    # support1 = X @ W1 in plain XLA (already near-peak for a dense matmul);
    # only the padded (Np, Hp) bf16 result enters the kernel.  Zero padding is
    # exact: padded adj rows/cols are zero, padded W/bias entries are zero.
    s1p = _pad2d(x @ params["w1"], Np, Hp, jnp.bfloat16)

    if adj.shape == (Np, Np) and adj.dtype == jnp.bfloat16:
        adjp = adj                                  # pre-padded & cached by caller
    else:
        adjp = _pad2d(adj, Np, Np, jnp.bfloat16)

    w2p = _pad2d(params["w2"], Hp, Hp, jnp.bfloat16)
    bias = jnp.stack([jnp.pad(params["b1"], (0, Hp - H)),
                      jnp.pad(params["b2"], (0, Hp - H))]
                     ).reshape(2, 1, Hp).astype(jnp.float32)

    # Keep adj fully resident (single HBM read, sliced in-kernel) when it fits
    # comfortably in the VMEM budget; otherwise stream (row_tile, Np) tiles.
    adj_bytes = 2 * Np * Np
    adj_resident = (2 * adj_bytes) <= (vmem_limit // 2)
    if adj_resident:
        adj_spec = pl.BlockSpec((Np, Np), lambda l, i: (0, 0))
    else:
        adj_spec = pl.BlockSpec((row_tile, Np), lambda l, i: (i, 0))

    kernel = functools.partial(_fused_gcn_kernel,
                               adj_resident=adj_resident, row_tile=row_tile)

    flops = 4 * Np * Np * Hp + 2 * Np * Hp * Hp
    bytes_accessed = ((1 if adj_resident else 2) * adj_bytes   # adj reads
                      + 2 * Np * Hp                            # support1 read
                      + 2 * Hp * Hp + 4 * 2 * Hp               # W2 + biases
                      + 4 * Np * Hp)                           # final output (f32)

    out = pl.pallas_call(
        kernel,
        # Final activations only (the hidden layer never touches HBM).  Output
        # is f32 for fidelity with the PyTorch module; bf16 would halve the
        # (already small) write traffic if downstream allowed it.
        out_shape=jax.ShapeDtypeStruct((Np, Hp), jnp.float32),
        grid_spec=pltpu.PrefetchScalarGridSpec(
            num_scalar_prefetch=0,
            grid=(2, nt),                                         # (layer, row tile)
            in_specs=[
                pl.BlockSpec((Np, Hp), lambda l, i: (0, 0)),       # support1 (resident)
                adj_spec,                                          # adj (resident|streamed)
                pl.BlockSpec((Hp, Hp), lambda l, i: (0, 0)),       # W2 (resident)
                pl.BlockSpec((None, 1, Hp), lambda l, i: (l, 0, 0)),  # stacked bias
            ],
            # Pin the output block to 0 during layer 0 (nothing is written
            # there), then walk row tiles during layer 1 -> each output block
            # is written back to HBM exactly once, with layer-1 data.
            out_specs=pl.BlockSpec((row_tile, Hp), lambda l, i: (l * i, 0)),
            scratch_shapes=[
                pltpu.VMEM((Np, Hp), jnp.bfloat16),   # support2 = h @ W2 (resident)
            ],
        ),
        compiler_params=pltpu.CompilerParams(
            # The resident support2 scratch is written across all layer-0 row
            # tiles and read by every layer-1 tile, so neither axis may be
            # sharded across TensorCores.
            dimension_semantics=("arbitrary", "arbitrary"),
            vmem_limit_bytes=vmem_limit,
        ),
        cost_estimate=pl.CostEstimate(flops=flops, transcendentals=0,
                                      bytes_accessed=bytes_accessed),
    )(s1p, adjp, w2p, bias)

    return out[:N, :H]


def reference_forward(x, adj, params):
    """Pure-JAX f32 reference of CustomGCN.forward (eval mode)."""
    h = jnp.maximum(adj @ (x @ params["w1"]) + params["b1"], 0.0)
    return jnp.maximum(adj @ (h @ params["w2"]) + params["b2"], 0.0)


def init_params(key, nfeat, nhid):
    """kaiming_uniform_ on an (in, out) tensor (PyTorch uses dim-1 as fan_in,
    gain=sqrt(2) for default a=0); zero biases — matches GraphConvolution."""
    k1, k2 = jax.random.split(key)

    def kaiming_uniform(k, shape):
        fan = shape[1]
        bound = jnp.sqrt(2.0) * jnp.sqrt(3.0 / fan)
        return jax.random.uniform(k, shape, jnp.float32, -bound, bound)

    return {
        "w1": kaiming_uniform(k1, (nfeat, nhid)),
        "b1": jnp.zeros((nhid,), jnp.float32),
        "w2": kaiming_uniform(k2, (nhid, nhid)),
        "b2": jnp.zeros((nhid,), jnp.float32),
    }


if __name__ == "__main__":
    key = jax.random.PRNGKey(0)
    k_x, k_adj, k_p = jax.random.split(key, 3)

    N, nfeat, nhid = 16, 32, 32  # small graph: 16 nodes, 32 features, 32 hidden

    x = jax.random.normal(k_x, (N, nfeat), jnp.float32)

    # Symmetric row-normalized dense adjacency, deterministic.
    a = (jax.random.uniform(k_adj, (N, N)) > 0.7).astype(jnp.float32)
    a = jnp.maximum(a, a.T) + jnp.eye(N, dtype=jnp.float32)
    a = jnp.minimum(a, 1.0)
    adj = a / jnp.sum(a, axis=1, keepdims=True)

    params = init_params(k_p, nfeat, nhid)

    # Pad + bf16-cast adj once; reuse the cached version for forward calls.
    adj_cached = preprocess_adj(adj, nhid)

    out = custom_gcn_forward(x, adj_cached, params)
    out = jax.block_until_ready(out)

    ref = reference_forward(x, adj, params)

    assert out.shape == (N, nhid)
    assert bool(jnp.all(out >= 0.0))
    max_err = float(jnp.max(jnp.abs(out - ref)))
    scale = float(jnp.max(jnp.abs(ref))) + 1e-6
    assert max_err <= 0.05 * scale + 0.05, f"mismatch: {max_err} (scale {scale})"

    print("KERNEL_OK")
</pallas_src>

<mosaic_0001>
module attributes {stable_mosaic.version = 11 : i64} {
  func.func @_fused_gcn_kernel(%arg0: i32, %arg1: i32, %arg2: memref<128x128xbf16, #tpu.memory_space<vmem>>, %arg3: memref<128x128xbf16, #tpu.memory_space<vmem>>, %arg4: memref<128x128xbf16, #tpu.memory_space<vmem>>, %arg5: memref<1x1x128xf32, #tpu.memory_space<vmem>>, %arg6: memref<128x128xf32, #tpu.memory_space<vmem>>, %arg7: memref<128x128xbf16, #tpu.memory_space<vmem>>) attributes {dimension_semantics = [#tpu.dimension_semantics<arbitrary>, #tpu.dimension_semantics<arbitrary>], iteration_bounds = array<i64: 2, 1>, scalar_prefetch = 0 : i64, scratch_operands = 1 : i64, tpu.core_type = #tpu.core_type<tc>, window_params = [{pipeline_mode = #tpu.pipeline_mode<synchronous>, transform_indices = @transform_0, window_bounds = array<i64: 128, 128>}, {pipeline_mode = #tpu.pipeline_mode<synchronous>, transform_indices = @transform_1, window_bounds = array<i64: 128, 128>}, {pipeline_mode = #tpu.pipeline_mode<synchronous>, transform_indices = @transform_2, window_bounds = array<i64: 128, 128>}, {transform_indices = @transform_3, window_bounds = array<i64: 1, 1, 128>}, {transform_indices = @transform_4, window_bounds = array<i64: 128, 128>}]} {
    %c128_i32 = arith.constant 128 : i32
    %0 = arith.muli %arg1, %c128_i32 : i32
    %1 = tpu.assume_multiple %0, 128 : i32
    %2 = arith.index_cast %1 : i32 to index
    %c0 = arith.constant 0 : index
    %3 = vector.load %arg3[%2, %c0] : memref<128x128xbf16, #tpu.memory_space<vmem>>, vector<128x128xbf16>
    %c0_0 = arith.constant 0 : index
    %c0_1 = arith.constant 0 : index
    %c0_2 = arith.constant 0 : index
    %4 = vector.load %arg5[%c0_0, %c0_1, %c0_2] : memref<1x1x128xf32, #tpu.memory_space<vmem>>, vector<1x1x128xf32>
    %5 = vector.shape_cast %4 : vector<1x1x128xf32> to vector<1x128xf32>
    %c0_i32 = arith.constant 0 : i32
    %6 = arith.cmpi eq, %arg0, %c0_i32 : i32
    %7 = arith.extui %6 : i1 to i32
    %c0_i32_3 = arith.constant 0 : i32
    %8 = arith.cmpi ne, %7, %c0_i32_3 : i32
    scf.if %8 {
      %c0_5 = arith.constant 0 : index
      %c0_6 = arith.constant 0 : index
      %12 = vector.load %arg2[%c0_5, %c0_6] : memref<128x128xbf16, #tpu.memory_space<vmem>>, vector<128x128xbf16>
      %cst = arith.constant dense<0.000000e+00> : vector<128x128xf32>
      %13 = tpu.matmul %3, %12, %cst {dimension_numbers = #tpu.dot_dimension_numbers<[1], [0], [0], [1], [0, 0, 1, 1], [], []>} : vector<128x128xbf16>, vector<128x128xbf16>, vector<128x128xf32> -> vector<128x128xf32>
      %14 = vector.broadcast %5 : vector<1x128xf32> to vector<128x128xf32>
      %15 = arith.addf %13, %14 : vector<128x128xf32>
      %cst_7 = arith.constant 0.000000e+00 : f32
      %16 = vector.broadcast %cst_7 : f32 to vector<128x128xf32>
      %17 = arith.maximumf %15, %16 : vector<128x128xf32>
      %18 = arith.truncf %17 : vector<128x128xf32> to vector<128x128xbf16>
      %c0_8 = arith.constant 0 : index
      %c0_9 = arith.constant 0 : index
      %19 = vector.load %arg4[%c0_8, %c0_9] : memref<128x128xbf16, #tpu.memory_space<vmem>>, vector<128x128xbf16>
      %cst_10 = arith.constant dense<0.000000e+00> : vector<128x128xf32>
      %20 = tpu.matmul %18, %19, %cst_10 {dimension_numbers = #tpu.dot_dimension_numbers<[1], [0], [0], [1], [0, 0, 1, 1], [], []>} : vector<128x128xbf16>, vector<128x128xbf16>, vector<128x128xf32> -> vector<128x128xf32>
      %21 = arith.truncf %20 : vector<128x128xf32> to vector<128x128xbf16>
      %22 = arith.index_cast %1 : i32 to index
      %c0_11 = arith.constant 0 : index
      %23 = vector.load %arg7[%22, %c0_11] : memref<128x128xbf16, #tpu.memory_space<vmem>>, vector<128x128xbf16>
      tpu.vector_store %arg7[%22, %c0_11], %21 {strides = array<i32>} : memref<128x128xbf16, #tpu.memory_space<vmem>>, vector<128x128xbf16>,
    } else {
    }
    %c1_i32 = arith.constant 1 : i32
    %9 = arith.cmpi eq, %arg0, %c1_i32 : i32
    %10 = arith.extui %9 : i1 to i32
    %c0_i32_4 = arith.constant 0 : i32
    %11 = arith.cmpi ne, %10, %c0_i32_4 : i32
    scf.if %11 {
      %c0_5 = arith.constant 0 : index
      %c0_6 = arith.constant 0 : index
      %12 = vector.load %arg7[%c0_5, %c0_6] : memref<128x128xbf16, #tpu.memory_space<vmem>>, vector<128x128xbf16>
      %cst = arith.constant dense<0.000000e+00> : vector<128x128xf32>
      %13 = tpu.matmul %3, %12, %cst {dimension_numbers = #tpu.dot_dimension_numbers<[1], [0], [0], [1], [0, 0, 1, 1], [], []>} : vector<128x128xbf16>, vector<128x128xbf16>, vector<128x128xf32> -> vector<128x128xf32>
      %14 = vector.broadcast %5 : vector<1x128xf32> to vector<128x128xf32>
      %15 = arith.addf %13, %14 : vector<128x128xf32>
      %cst_7 = arith.constant 0.000000e+00 : f32
      %16 = vector.broadcast %cst_7 : f32 to vector<128x128xf32>
      %17 = arith.maximumf %15, %16 : vector<128x128xf32>
      %c0_8 = arith.constant 0 : index
      %c0_9 = arith.constant 0 : index
      %18 = vector.load %arg6[%c0_8, %c0_9] : memref<128x128xf32, #tpu.memory_space<vmem>>, vector<128x128xf32>
      tpu.vector_store %arg6[%c0_8, %c0_9], %17 {strides = array<i32>} : memref<128x128xf32, #tpu.memory_space<vmem>>, vector<128x128xf32>,
    } else {
    }
    return
  }
  func.func @transform_0(%arg0: i32, %arg1: i32) -> (i32, i32) {
    %c0_i32 = arith.constant 0 : i32
    %c0_i32_0 = arith.constant 0 : i32
    %c0_i32_1 = arith.constant 0 : i32
    return %c0_i32, %c0_i32_0 : i32, i32
  }
  func.func @transform_1(%arg0: i32, %arg1: i32) -> (i32, i32) {
    %c0_i32 = arith.constant 0 : i32
    %c0_i32_0 = arith.constant 0 : i32
    %c0_i32_1 = arith.constant 0 : i32
    return %c0_i32, %c0_i32_0 : i32, i32
  }
  func.func @transform_2(%arg0: i32, %arg1: i32) -> (i32, i32) {
    %c0_i32 = arith.constant 0 : i32
    %c0_i32_0 = arith.constant 0 : i32
    %c0_i32_1 = arith.constant 0 : i32
    return %c0_i32, %c0_i32_0 : i32, i32
  }
  func.func @transform_3(%arg0: i32, %arg1: i32) -> (i32, i32, i32) {
    %c0_i32 = arith.constant 0 : i32
    %c0_i32_0 = arith.constant 0 : i32
    %c0_i32_1 = arith.constant 0 : i32
    return %arg0, %c0_i32, %c0_i32_0 : i32, i32, i32
  }
  func.func @transform_4(%arg0: i32, %arg1: i32) -> (i32, i32) {
    %0 = arith.muli %arg0, %arg1 : i32
    %c0_i32 = arith.constant 0 : i32
    %c0_i32_0 = arith.constant 0 : i32
    return %0, %c0_i32 : i32, i32
  }
}

</mosaic_0001>

<llo_original>
// kernel: tpu_custom_call.1
$region0: #{tpu_custom_call.1}
  #allocation0 [shape = 'u32[]', space=smem, size = 0x4, offset = 0x4, fixed_abs, tag = 'smem constant byte address 0x4 - core index']
  #allocation1 [shape = 'u32[144,128]{1,0:T(1,128)}', space=vmem, size = 0x12000, scoped, tag = 'internal scratch']
  #allocation2 [shape = 'bf16[128,128]{1,0:T(16,128)(2,1)}', space=vmem, size = 0x8000, scoped, tag = 'scratch operand']
  %s0 = inlined_call_operand.hbm [shape: bf16[128,128], index: 0, kind: input, shape index: {}]
  %s1 = inlined_call_operand.hbm [shape: bf16[128,128], index: 1, kind: input, shape index: {}]
  %s2 = inlined_call_operand.hbm [shape: bf16[128,128], index: 2, kind: input, shape index: {}]
  %s3 = inlined_call_operand.vmem [shape: f32[2,1,128], index: 3, kind: input, shape index: {}]
  %s4 = inlined_call_operand.hbm [shape: f32[128,128], index: 4, kind: output, shape index: {}]
  %s5 = sld [smem:[#allocation0]]
  $region69: #{tpu_custom_call.1} parent=0
    _
  %s7 = ssub.s32 1, %s5
  %s8 = scalar_select 0, %s7, %s5
  $region1: #{tpu_custom_call.1} parent=0
    #allocation3 [shape = 'u8[32768]{0}', space=vmem, size = 0x8000, scoped, tag = 'input window, operand 0, single buffered']
    #allocation4 [shape = 's32[2]{0}', space=sflag, size = 0x8, scoped, tag = 'scoped memory for tpu_custom_call.1']
    #allocation5 [shape = 's32[2]{0}', space=sflag, size = 0x8, scoped, tag = 'scoped memory for tpu_custom_call.1']
    #allocation6 [shape = 'u8[32768]{0}', space=vmem, size = 0x8000, scoped, tag = 'input window, operand 1, single buffered']
    #allocation7 [shape = 's32[1]{0}', space=sflag, size = 0x4, scoped, tag = 'scoped memory for tpu_custom_call.1']
    #allocation8 [shape = 'u8[32768]{0}', space=vmem, size = 0x8000, scoped, tag = 'input window, operand 2, single buffered']
    #allocation9 [shape = 'u8[131072]{0}', space=vmem, size = 0x20000, scoped, tag = 'output window, operand 0']
    %9 = vsyncpa [#allocation4], 0
    %10 = vsyncpa [#allocation7], 0
    %11 = vsyncpa [#allocation5], 0
    %s12 = scalar_lea.sflag [#allocation5], 1
    %13 = vsyncpa %s12, 0
    loop: start=0, step=1, limit=4
    $region2: #{tpu_custom_call.1} parent=1 // loop_pre_header
      _
    $region3: #{tpu_custom_call.1} parent=1 // loop_header
      %s15 = sphi 0, %s19
      %p16 = scmp.ge.s32.totalorder %s15, 4
      %s22 = sphi 0, %s34
      %s23 = sphi 0, %s30
      %s24 = sphi 0, %s22
      %s25 = sphi 0, %s23
      %s26 = sphi 0, %s24
      %s27 = sphi 0, %s25
      %s35 = sphi 0, %s35
      %s37 = sphi 0, %s35
      %s38 = sphi 0, %s37
      %s52 = sphi 0, %s38
      %s56 = sphi 0, %s56
      %s58 = sphi 0, %s56
      %s59 = sphi 0, %s58
      %s73 = sphi 0, %s59
      %s77 = sphi 0, %s77
      %s79 = sphi 0, %s77
      %s80 = sphi 0, %s79
      %s94 = sphi 0, %s80
      %s100 = sphi 0, %s102
      %s103 = sphi 0, %s100
      %s104 = sphi 0, %s103
      %s120 = sphi 0, %s104
      %s128 = sphi 0, %s130
      %s131 = sphi 0, %s128
      %s132 = sphi 0, %s131
      %s148 = sphi 0, %s132
    $region4: #{tpu_custom_call.1} parent=1 // loop_header_branch
      %18 = sbr.rel (%p16) target = $region8
    $region5: #{tpu_custom_call.1} parent=1 // loop_body
      %s20 = ssub.s32 %s15, 1
      %s21 = ssub.s32 %s15, 2
      %s28 = sadd.s32 1, %s23
      %p29 = scmp.ge.s32.totalorder %s28, 1
      %s30 = scalar_select %p29, 0, %s28
      %s31 = sadd.s32 1, %s22
      %s32 = scalar_select %p29, %s31, %s22
      %p33 = scmp.ge.s32.totalorder %s32, 2
      %s34 = scalar_select %p33, 0, %s32
      %s36 = sadd.s32 %s35, 1
      %p39 = scmp.eq.s32.totalorder %s15, 1
      %p40 = scmp.ne.s32.totalorder %s35, %s37
      %p41 = scmp.eq.s32.totalorder %s15, 0
      %p42 = por %p40, %p41
      %p43 = scmp.ne.s32.totalorder %s35, %s37
      %p44 = scmp.eq.s32.totalorder %s20, 1
      %p45 = por %p43, %p44
      %p46 = scmp.ne.s32.totalorder %s37, %s38
      %p47 = scmp.eq.s32.totalorder %s20, 0
      %p48 = por %p46, %p47
      %p49 = scmp.ne.s32.totalorder %s37, %s38
      %p50 = scmp.eq.s32.totalorder %s21, 1
      %p51 = por %p49, %p50
      %p53 = scmp.ne.s32.totalorder %s38, %s52
      %p54 = scmp.eq.s32.totalorder %s21, 0
      %p55 = por %p53, %p54
      %s57 = sadd.s32 %s56, 1
      %p60 = scmp.eq.s32.totalorder %s15, 1
      %p61 = scmp.ne.s32.totalorder %s56, %s58
      %p62 = scmp.eq.s32.totalorder %s15, 0
      %p63 = por %p61, %p62
      %p64 = scmp.ne.s32.totalorder %s56, %s58
      %p65 = scmp.eq.s32.totalorder %s20, 1
      %p66 = por %p64, %p65
      %p67 = scmp.ne.s32.totalorder %s58, %s59
      %p68 = scmp.eq.s32.totalorder %s20, 0
      %p69 = por %p67, %p68
      %p70 = scmp.ne.s32.totalorder %s58, %s59
      %p71 = scmp.eq.s32.totalorder %s21, 1
      %p72 = por %p70, %p71
      %p74 = scmp.ne.s32.totalorder %s59, %s73
      %p75 = scmp.eq.s32.totalorder %s21, 0
      %p76 = por %p74, %p75
      %s78 = sadd.s32 %s77, 1
      %p81 = scmp.eq.s32.totalorder %s15, 1
      %p82 = scmp.ne.s32.totalorder %s77, %s79
      %p83 = scmp.eq.s32.totalorder %s15, 0
      %p84 = por %p82, %p83
      %p85 = scmp.ne.s32.totalorder %s77, %s79
      %p86 = scmp.eq.s32.totalorder %s20, 1
      %p87 = por %p85, %p86
      %p88 = scmp.ne.s32.totalorder %s79, %s80
      %p89 = scmp.eq.s32.totalorder %s20, 0
      %p90 = por %p88, %p89
      %p91 = scmp.ne.s32.totalorder %s79, %s80
      %p92 = scmp.eq.s32.totalorder %s21, 1
      %p93 = por %p91, %p92
      %p95 = scmp.ne.s32.totalorder %s80, %s94
      %p96 = scmp.eq.s32.totalorder %s21, 0
      %p97 = por %p95, %p96
      %s98 = ssub.s32 %s22, %s34
      %p99 = scmp.eq.s32.totalorder %s98, 0
      %s101 = sadd.s32 %s100, 1
      %s102 = scalar_select %p99, %s100, %s101
      %p105 = pneg %p99
      %p106 = scmp.eq.s32.totalorder %s15, 1
      %p107 = por %p105, %p106
      %p108 = scmp.ne.s32.totalorder %s100, %s103
      %p109 = scmp.eq.s32.totalorder %s15, 0
      %p110 = por %p108, %p109
      %p111 = scmp.ne.s32.totalorder %s100, %s103
      %p112 = scmp.eq.s32.totalorder %s20, 1
      %p113 = por %p111, %p112
      %p114 = scmp.ne.s32.totalorder %s103, %s104
      %p115 = scmp.eq.s32.totalorder %s20, 0
      %p116 = por %p114, %p115
      %p117 = scmp.ne.s32.totalorder %s103, %s104
      %p118 = scmp.eq.s32.totalorder %s21, 1
      %p119 = por %p117, %p118
      %p121 = scmp.ne.s32.totalorder %s104, %s120
      %p122 = scmp.eq.s32.totalorder %s21, 0
      %p123 = por %p121, %p122
      %s124 = smul.u32 %s22, %s23
      %s125 = smul.u32 %s34, %s30
      %s126 = ssub.s32 %s124, %s125
      %p127 = scmp.eq.s32.totalorder %s126, 0
      %s129 = sadd.s32 %s128, 1
      %s130 = scalar_select %p127, %s128, %s129
      %p133 = pneg %p127
      %p134 = scmp.eq.s32.totalorder %s15, 1
      %p135 = por %p133, %p134
      %p136 = scmp.ne.s32.totalorder %s128, %s131
      %p137 = scmp.eq.s32.totalorder %s15, 0
      %p138 = por %p136, %p137
      %p139 = scmp.ne.s32.totalorder %s128, %s131
      %p140 = scmp.eq.s32.totalorder %s20, 1
      %p141 = por %p139, %p140
      %p142 = scmp.ne.s32.totalorder %s131, %s132
      %p143 = scmp.eq.s32.totalorder %s20, 0
      %p144 = por %p142, %p143
      %p145 = scmp.ne.s32.totalorder %s131, %s132
      %p146 = scmp.eq.s32.totalorder %s21, 1
      %p147 = por %p145, %p146
      %p149 = scmp.ne.s32.totalorder %s132, %s148
      %p150 = scmp.eq.s32.totalorder %s21, 0
      %p151 = por %p149, %p150
      %p152 = scmp.le.s32.totalorder 1, %s15
      %p153 = scmp.lt.s32.totalorder %s15, 3
      %p154 = pnand %p152, %p153
      %p155 = pneg %p154
      // Predicated region
      $region9: #{tpu_custom_call.1} parent=5 // pred_check
        _
      $region10: #{tpu_custom_call.1} parent=5 // pred_check_branch
        %157 = sbr.rel (%p154) target = $region12
      $region11: #{tpu_custom_call.1} parent=5 // pred_region
        %s158 = ssub.s32 %s15, 1
        // Predicated region
        $region13: #{tpu_custom_call.1} parent=11 // pred_check
          %p159 = pneg %p48
        $region14: #{tpu_custom_call.1} parent=11 // pred_check_branch
          %161 = sbr.rel (%p159) target = $region16
        $region15: #{tpu_custom_call.1} parent=11 // pred_region
          %s163 = ssub.s32 1024, 1024
          %164 = vsyncadd [#allocation4], %s163
          %s165 = sshll.u32 [#allocation3], 4
          %s166 = int_to_ptr.vmem [resolvable:$true] %s165
          %171 = dma.hbm_to_vmem [thread:$0]  %s0, 1024, %s166, [#allocation4], 64, 64, 4
        $region16: #{tpu_custom_call.1} parent=11 // pred_fallthru
          _
        // Predicated region
        $region17: #{tpu_custom_call.1} parent=11 // pred_check
          %p172 = pneg %p69
        $region18: #{tpu_custom_call.1} parent=11 // pred_check_branch
          %174 = sbr.rel (%p172) target = $region20
        $region19: #{tpu_custom_call.1} parent=11 // pred_region
          %s176 = ssub.s32 1024, 1024
          %177 = vsyncadd [#allocation7], %s176
          %s178 = sshll.u32 [#allocation6], 4
          %s179 = int_to_ptr.vmem [resolvable:$true] %s178
          %184 = dma.hbm_to_vmem [thread:$0]  %s1, 1024, %s179, [#allocation7], 64, 64, 4
        $region20: #{tpu_custom_call.1} parent=11 // pred_fallthru
          _
        // Predicated region
        $region21: #{tpu_custom_call.1} parent=11 // pred_check
          %p185 = pneg %p90
        $region22: #{tpu_custom_call.1} parent=11 // pred_check_branch
          %187 = sbr.rel (%p185) target = $region24
        $region23: #{tpu_custom_call.1} parent=11 // pred_region
          %s189 = ssub.s32 1024, 1024
          %190 = vsyncadd [#allocation7], %s189
          %s191 = sshll.u32 [#allocation8], 4
          %s192 = int_to_ptr.vmem [resolvable:$true] %s191
          %197 = dma.hbm_to_vmem [thread:$0]  %s2, 1024, %s192, [#allocation7], 64, 64, 4
        $region24: #{tpu_custom_call.1} parent=11 // pred_fallthru
          _
      $region12: #{tpu_custom_call.1} parent=5 // pred_fallthru
        _
      %p198 = scmp.lt.s32.totalorder %s15, 2
      // Predicated region
      $region25: #{tpu_custom_call.1} parent=5 // pred_check
        %p199 = pneg %p198
      $region26: #{tpu_custom_call.1} parent=5 // pred_check_branch
        %201 = sbr.rel (%p199) target = $region28
      $region27: #{tpu_custom_call.1} parent=5 // pred_region
        // Predicated region
        $region29: #{tpu_custom_call.1} parent=27 // pred_check
          %p202 = pneg %p110
        $region30: #{tpu_custom_call.1} parent=27 // pred_check_branch
          %204 = sbr.rel (%p202) target = $region32
        $region31: #{tpu_custom_call.1} parent=27 // pred_region
          %p205 = scmp.lt.s32.totalorder %s22, 1
          %s206 = scalar_select %p205, %s22, 1
          %s207 = scalar_lea.vmem %s3, %s206
        $region32: #{tpu_custom_call.1} parent=27 // pred_fallthru
          _
      $region28: #{tpu_custom_call.1} parent=5 // pred_fallthru
        _
      %p208 = scmp.le.s32.totalorder 1, %s15
      %p209 = scmp.lt.s32.totalorder %s15, 3
      %p210 = pnand %p208, %p209
      %p211 = pneg %p210
      // Predicated region
      $region33: #{tpu_custom_call.1} parent=5 // pred_check
        _
      $region34: #{tpu_custom_call.1} parent=5 // pred_check_branch
        %213 = sbr.rel (%p210) target = $region36
      $region35: #{tpu_custom_call.1} parent=5 // pred_region
        %s214 = ssub.s32 %s15, 1
        // Predicated region
        $region37: #{tpu_custom_call.1} parent=35 // pred_check
          %p215 = pneg %p48
        $region38: #{tpu_custom_call.1} parent=35 // pred_check_branch
          %217 = sbr.rel (%p215) target = $region40
        $region39: #{tpu_custom_call.1} parent=35 // pred_region
          %218 = dma.done [#allocation4], 1024
        $region40: #{tpu_custom_call.1} parent=35 // pred_fallthru
          _
        // Predicated region
        $region41: #{tpu_custom_call.1} parent=35 // pred_check
          %p219 = pneg %p69
        $region42: #{tpu_custom_call.1} parent=35 // pred_check_branch
          %221 = sbr.rel (%p219) target = $region44
        $region43: #{tpu_custom_call.1} parent=35 // pred_region
          %222 = dma.done [#allocation7], 1024
        $region44: #{tpu_custom_call.1} parent=35 // pred_fallthru
          _
        // Predicated region
        $region45: #{tpu_custom_call.1} parent=35 // pred_check
          %p223 = pneg %p90
        $region46: #{tpu_custom_call.1} parent=35 // pred_check_branch
          %225 = sbr.rel (%p223) target = $region48
        $region47: #{tpu_custom_call.1} parent=35 // pred_region
          %226 = dma.done [#allocation7], 1024
        $region48: #{tpu_custom_call.1} parent=35 // pred_fallthru
          _
        %p227 = pneg %p48
        %p228 = pneg %p45
        %p229 = pneg %p69
        %p230 = pneg %p66
        %p231 = pneg %p90
        %p232 = pneg %p87
        %p233 = scmp.lt.s32.totalorder %s24, 1
        %s234 = scalar_select %p233, %s24, 1
        %s235 = scalar_lea.vmem %s3, %s234
        %p236 = pneg %p116
        %p237 = pneg %p113
        %p238 = pneg %p144
        %p239 = pneg %p141
        %s240 = sand.u32 %s131, 1
        %s241 = scalar_lea.sflag [#allocation5], %s240
        %s242 = sand.u32 %s131, 1
        %s243 = smul.addr %s242, 128
        %s244 = scalar_lea.vmem [#allocation9], %s243
        %p245 = scmp.lt.s32.totalorder %s24, 1
        %s246 = scalar_select %p245, %s24, 1
        %s247 = scalar_lea.vmem %s3, %s246
        %s248 = smul.u32 %s24, %s25
        %s249 = smul.u32 16, %s248
        %s251 = smul.u32 %s25, 128
        %s252 = sshra.s32 %s251, 3
        %s253 = sand.u32 %s251, 7
        %s254 = smul.addr %s252, 4
        %s255 = scalar_lea.vmem [#allocation6], %s254
        %v256 = vld [vmem:[%s255] sm:$0xf]
        %v257 = vld [vmem:[%s255 + $0x4] sm:$0xf]
        %v258 = vld [vmem:[%s255 + $0x8] sm:$0xf]
        %v259 = vld [vmem:[%s255 + $0xc] sm:$0xf]
        %v260 = vld [vmem:[%s255 + $0x10] sm:$0xf]
        %v261 = vld [vmem:[%s255 + $0x14] sm:$0xf]
        %v262 = vld [vmem:[%s255 + $0x18] sm:$0xf]
        %v263 = vld [vmem:[%s255 + $0x1c] sm:$0xf]
        %v264 = vld [vmem:[%s255 + $0x20] sm:$0xf]
        %v265 = vld [vmem:[%s255 + $0x24] sm:$0xf]
        %v266 = vld [vmem:[%s255 + $0x28] sm:$0xf]
        %v267 = vld [vmem:[%s255 + $0x2c] sm:$0xf]
        %v268 = vld [vmem:[%s255 + $0x30] sm:$0xf]
        %v269 = vld [vmem:[%s255 + $0x34] sm:$0xf]
        %v270 = vld [vmem:[%s255 + $0x38] sm:$0xf]
        %v271 = vld [vmem:[%s255 + $0x3c] sm:$0xf]
        %v272 = vld [vmem:[%s247] sm:$0x1]
        %p273 = scmp.eq.s32.totalorder %s24, 0
        // Predicated region
        $region49: #{tpu_custom_call.1} parent=35 // pred_check
          %p274 = pneg %p273
        $region50: #{tpu_custom_call.1} parent=35 // pred_check_branch
          %276 = sbr.rel (%p274) target = $region52
        $region51: #{tpu_custom_call.1} parent=35 // pred_region
          %v277 = vld [vmem:[#allocation3] sm:$0xf]
          %v278 = vld [vmem:[#allocation3 + $0x4] sm:$0xf]
          %v279 = vld [vmem:[#allocation3 + $0x8] sm:$0xf]
          %v280 = vld [vmem:[#allocation3 + $0xc] sm:$0xf]
          %v281 = vld [vmem:[#allocation3 + $0x10] sm:$0xf]
          %v282 = vld [vmem:[#allocation3 + $0x14] sm:$0xf]
          %v283 = vld [vmem:[#allocation3 + $0x18] sm:$0xf]
          %v284 = vld [vmem:[#allocation3 + $0x1c] sm:$0xf]
          %v285 = vld [vmem:[#allocation3 + $0x20] sm:$0xf]
          %v286 = vld [vmem:[#allocation3 + $0x24] sm:$0xf]
          %v287 = vld [vmem:[#allocation3 + $0x28] sm:$0xf]
          %v288 = vld [vmem:[#allocation3 + $0x2c] sm:$0xf]
          %v289 = vld [vmem:[#allocation3 + $0x30] sm:$0xf]
          %v290 = vld [vmem:[#allocation3 + $0x34] sm:$0xf]
          %v291 = vld [vmem:[#allocation3 + $0x38] sm:$0xf]
          %v292 = vld [vmem:[#allocation3 + $0x3c] sm:$0xf]
          %v294 = vlaneseq
          %v295 = vshrl.u32 %v294, 7
          %v296 = vsub.s32 0, %v295
          %v297 = vrot.slane %v272, %v296
          %v315 = vunpack.c.l.b16 %v256
          %v316 = vunpack.c.l.b16 %v257
          %v317 = vunpack.c.l.b16 %v258
          %v318 = vunpack.c.l.b16 %v259
          %v319 = vunpack.c.l.b16 %v260
          %v320 = vunpack.c.l.b16 %v261
          %v321 = vunpack.c.l.b16 %v262
          %v322 = vunpack.c.l.b16 %v263
          %v323 = vunpack.c.l.b16 %v264
          %v324 = vunpack.c.l.b16 %v265
          %v325 = vunpack.c.l.b16 %v266
          %v326 = vunpack.c.l.b16 %v267
          %v327 = vunpack.c.l.b16 %v268
          %v328 = vunpack.c.l.b16 %v269
          %v329 = vunpack.c.l.b16 %v270
          %v330 = vunpack.c.l.b16 %v271
          %v331 = vpack.c.b16 %v316, %v315
          %v332 = vpack.c.b16 %v318, %v317
          %v333 = vpack.c.b16 %v320, %v319
          %v334 = vpack.c.b16 %v322, %v321
          %v335 = vpack.c.b16 %v324, %v323
          %v336 = vpack.c.b16 %v326, %v325
          %v337 = vpack.c.b16 %v328, %v327
          %v338 = vpack.c.b16 %v330, %v329
          %v363 = vunpack.c.l.b16 %v277
          %v364 = vunpack.c.l.b16 %v278
          %v365 = vunpack.c.l.b16 %v279
          %v366 = vunpack.c.l.b16 %v280
          %v367 = vunpack.c.l.b16 %v281
          %v368 = vunpack.c.l.b16 %v282
          %v369 = vunpack.c.l.b16 %v283
          %v370 = vunpack.c.l.b16 %v284
          %v371 = vunpack.c.l.b16 %v285
          %v372 = vunpack.c.l.b16 %v286
          %v373 = vunpack.c.l.b16 %v287
          %v374 = vunpack.c.l.b16 %v288
          %v375 = vunpack.c.l.b16 %v289
          %v376 = vunpack.c.l.b16 %v290
          %v377 = vunpack.c.l.b16 %v291
          %v378 = vunpack.c.l.b16 %v292
          %v379 = vpack.c.b16 %v364, %v363
          %v380 = vpack.c.b16 %v366, %v365
          %v381 = vpack.c.b16 %v368, %v367
          %v382 = vpack.c.b16 %v370, %v369
          %v383 = vpack.c.b16 %v372, %v371
          %v384 = vpack.c.b16 %v374, %v373
          %v385 = vpack.c.b16 %v376, %v375
          %v386 = vpack.c.b16 %v378, %v377
          %395 = vmatprep.subr.bf16.mxu0 0
          %396 = vmatpush1.bf16.msra.mxu0 %v379
          %397 = vmatprep.subr.bf16.mxu0 0
          %398 = vmatpush1.bf16.msra.mxu0 %v380
          %399 = vmatprep.subr.bf16.mxu0 0
          %400 = vmatpush1.bf16.msra.mxu0 %v381
          %401 = vmatprep.subr.bf16.mxu0 0
          %402 = vmatpush1.bf16.msra.mxu0 %v382
          %403 = vmatprep.subr.bf16.mxu0 0
          %404 = vmatpush1.bf16.msra.mxu0 %v383
          %405 = vmatprep.subr.bf16.mxu0 0
          %406 = vmatpush1.bf16.msra.mxu0 %v384
          %407 = vmatprep.subr.bf16.mxu0 0
          %408 = vmatpush1.bf16.msra.mxu0 %v385
          %409 = vmatprep.subr.bf16.mxu0 0
          %410 = vmatpush1.bf16.msra.mxu0 %v386
          %411 = vmatprep.subr.bf16.mxu0 0
          %412 = vmatpush1.bf16.msra.mxu0 0
          %413 = vmatprep.subr.bf16.mxu0 0
          %414 = vmatpush1.bf16.msra.mxu0 0
          %415 = vmatprep.subr.bf16.mxu0 0
          %416 = vmatpush1.bf16.msra.mxu0 0
          %417 = vmatprep.subr.bf16.mxu0 0
          %418 = vmatpush1.bf16.msra.mxu0 0
          %419 = vmatprep.subr.bf16.mxu0 0
          %420 = vmatpush1.bf16.msra.mxu0 0
          %421 = vmatprep.subr.bf16.mxu0 0
          %422 = vmatpush1.bf16.msra.mxu0 0
          %423 = vmatprep.subr.bf16.mxu0 0
          %424 = vmatpush1.bf16.msra.mxu0 0
          %425 = vmatprep.subr.bf16.mxu0 0
          %426 = vmatpush1.bf16.msra.mxu0 0
          %427 = vmatprep.mubr.bf16.mxu0 0
          %428 = vmatmul.mubr.bf16.gmra.mrb[0].mxu0 %v331
          %v429 = vpop.f32.mrb[0].mxu0
          %v430 = vadd.f32 %v297, %v429
          %v431 = vpop.f32.mrb[0].mxu0
          %v432 = vpop.f32.mrb[0].mxu0
          %v433 = vadd.f32 %v297, %v432
          %v434 = vpop.f32.mrb[0].mxu0
          %435 = vmatprep.mubr.bf16.mxu0 0
          %436 = vmatmul.mubr.bf16.gmra.mrb[0].mxu0 %v332
          %v437 = vpop.f32.mrb[0].mxu0
          %v438 = vadd.f32 %v297, %v437
          %v439 = vpop.f32.mrb[0].mxu0
          %v440 = vpop.f32.mrb[0].mxu0
          %v441 = vadd.f32 %v297, %v440
          %v442 = vpop.f32.mrb[0].mxu0
          %443 = vmatprep.mubr.bf16.mxu0 0
          %444 = vmatmul.mubr.bf16.gmra.mrb[0].mxu0 %v333
          %v445 = vpop.f32.mrb[0].mxu0
          %v446 = vadd.f32 %v297, %v445
          %v447 = vpop.f32.mrb[0].mxu0
          %v448 = vpop.f32.mrb[0].mxu0
          %v449 = vadd.f32 %v297, %v448
          %v450 = vpop.f32.mrb[0].mxu0
          %451 = vmatprep.mubr.bf16.mxu0 0
          %452 = vmatmul.mubr.bf16.gmra.mrb[0].mxu0 %v334
          %v453 = vpop.f32.mrb[0].mxu0
          %v454 = vadd.f32 %v297, %v453
          %v455 = vpop.f32.mrb[0].mxu0
          %v456 = vpop.f32.mrb[0].mxu0
          %v457 = vadd.f32 %v297, %v456
          %v458 = vpop.f32.mrb[0].mxu0
          %459 = vmatprep.mubr.bf16.mxu0 0
          %460 = vmatmul.mubr.bf16.gmra.mrb[0].mxu0 %v335
          %v461 = vpop.f32.mrb[0].mxu0
          %v462 = vadd.f32 %v297, %v461
          %v463 = vpop.f32.mrb[0].mxu0
          %v464 = vpop.f32.mrb[0].mxu0
          %v465 = vadd.f32 %v297, %v464
          %v466 = vpop.f32.mrb[0].mxu0
          %467 = vmatprep.mubr.bf16.mxu0 0
          %468 = vmatmul.mubr.bf16.gmra.mrb[0].mxu0 %v336
          %v469 = vpop.f32.mrb[0].mxu0
          %v470 = vadd.f32 %v297, %v469
          %v471 = vpop.f32.mrb[0].mxu0
          %v472 = vpop.f32.mrb[0].mxu0
          %v473 = vadd.f32 %v297, %v472
          %v474 = vpop.f32.mrb[0].mxu0
          %475 = vmatprep.mubr.bf16.mxu0 0
          %476 = vmatmul.mubr.bf16.gmra.mrb[0].mxu0 %v337
          %v477 = vpop.f32.mrb[0].mxu0
          %v478 = vadd.f32 %v297, %v477
          %v479 = vpop.f32.mrb[0].mxu0
          %v480 = vpop.f32.mrb[0].mxu0
          %v481 = vadd.f32 %v297, %v480
          %v482 = vpop.f32.mrb[0].mxu0
          %483 = vmatprep.mubr.bf16.mxu0 0
          %484 = vmatmul.mubr.bf16.gmra.mrb[0].mxu0 %v338
          %v485 = vpop.f32.mrb[0].mxu0
          %v486 = vadd.f32 %v297, %v485
          %v487 = vpop.f32.mrb[0].mxu0
          %v488 = vpop.f32.mrb[0].mxu0
          %v489 = vadd.f32 %v297, %v488
          %v490 = vpop.f32.mrb[0].mxu0
          %491 = vdwg.mxu0
          %v492 = vmax.f32 %v430, 0.0
          %v493 = vmax.f32 %v433, 0.0
          %v494 = vmax.f32 %v438, 0.0
          %v495 = vmax.f32 %v441, 0.0
          %v496 = vmax.f32 %v446, 0.0
          %v497 = vmax.f32 %v449, 0.0
          %v498 = vmax.f32 %v454, 0.0
          %v499 = vmax.f32 %v457, 0.0
          %v500 = vmax.f32 %v462, 0.0
          %v501 = vmax.f32 %v465, 0.0
          %v502 = vmax.f32 %v470, 0.0
          %v503 = vmax.f32 %v473, 0.0
          %v504 = vmax.f32 %v478, 0.0
          %v505 = vmax.f32 %v481, 0.0
          %v506 = vmax.f32 %v486, 0.0
          %v507 = vmax.f32 %v489, 0.0
          %v508 = vpack.c.bf16 %v493, %v492
          %v509 = vpack.c.bf16 %v495, %v494
          %v510 = vpack.c.bf16 %v497, %v496
          %v511 = vpack.c.bf16 %v499, %v498
          %v512 = vpack.c.bf16 %v501, %v500
          %v513 = vpack.c.bf16 %v503, %v502
          %v514 = vpack.c.bf16 %v505, %v504
          %v515 = vpack.c.bf16 %v507, %v506
          %v516 = vld [vmem:[#allocation8] sm:$0xf]
          %v517 = vld [vmem:[#allocation8 + $0x4] sm:$0xf]
          %v518 = vld [vmem:[#allocation8 + $0x8] sm:$0xf]
          %v519 = vld [vmem:[#allocation8 + $0xc] sm:$0xf]
          %v520 = vld [vmem:[#allocation8 + $0x10] sm:$0xf]
          %v521 = vld [vmem:[#allocation8 + $0x14] sm:$0xf]
          %v522 = vld [vmem:[#allocation8 + $0x18] sm:$0xf]
          %v523 = vld [vmem:[#allocation8 + $0x1c] sm:$0xf]
          %v524 = vld [vmem:[#allocation8 + $0x20] sm:$0xf]
          %v525 = vld [vmem:[#allocation8 + $0x24] sm:$0xf]
          %v526 = vld [vmem:[#allocation8 + $0x28] sm:$0xf]
          %v527 = vld [vmem:[#allocation8 + $0x2c] sm:$0xf]
          %v528 = vld [vmem:[#allocation8 + $0x30] sm:$0xf]
          %v529 = vld [vmem:[#allocation8 + $0x34] sm:$0xf]
          %v530 = vld [vmem:[#allocation8 + $0x38] sm:$0xf]
          %v531 = vld [vmem:[#allocation8 + $0x3c] sm:$0xf]
          %v548 = vunpack.c.l.b16 %v516
          %v549 = vunpack.c.l.b16 %v517
          %v550 = vunpack.c.l.b16 %v518
          %v551 = vunpack.c.l.b16 %v519
          %v552 = vunpack.c.l.b16 %v520
          %v553 = vunpack.c.l.b16 %v521
          %v554 = vunpack.c.l.b16 %v522
          %v555 = vunpack.c.l.b16 %v523
          %v556 = vunpack.c.l.b16 %v524
          %v557 = vunpack.c.l.b16 %v525
          %v558 = vunpack.c.l.b16 %v526
          %v559 = vunpack.c.l.b16 %v527
          %v560 = vunpack.c.l.b16 %v528
          %v561 = vunpack.c.l.b16 %v529
          %v562 = vunpack.c.l.b16 %v530
          %v563 = vunpack.c.l.b16 %v531
          %v564 = vpack.c.b16 %v549, %v548
          %v565 = vpack.c.b16 %v551, %v550
          %v566 = vpack.c.b16 %v553, %v552
          %v567 = vpack.c.b16 %v555, %v554
          %v568 = vpack.c.b16 %v557, %v556
          %v569 = vpack.c.b16 %v559, %v558
          %v570 = vpack.c.b16 %v561, %v560
          %v571 = vpack.c.b16 %v563, %v562
          %580 = vmatprep.subr.bf16.mxu0 0
          %581 = vmatpush1.bf16.msra.mxu0 %v564
          %582 = vmatprep.subr.bf16.mxu0 0
          %583 = vmatpush1.bf16.msra.mxu0 %v565
          %584 = vmatprep.subr.bf16.mxu0 0
          %585 = vmatpush1.bf16.msra.mxu0 %v566
          %586 = vmatprep.subr.bf16.mxu0 0
          %587 = vmatpush1.bf16.msra.mxu0 %v567
          %588 = vmatprep.subr.bf16.mxu0 0
          %589 = vmatpush1.bf16.msra.mxu0 %v568
          %590 = vmatprep.subr.bf16.mxu0 0
          %591 = vmatpush1.bf16.msra.mxu0 %v569
          %592 = vmatprep.subr.bf16.mxu0 0
          %593 = vmatpush1.bf16.msra.mxu0 %v570
          %594 = vmatprep.subr.bf16.mxu0 0
          %595 = vmatpush1.bf16.msra.mxu0 %v571
          %596 = vmatprep.subr.bf16.mxu0 0
          %597 = vmatpush1.bf16.msra.mxu0 0
          %598 = vmatprep.subr.bf16.mxu0 0
          %599 = vmatpush1.bf16.msra.mxu0 0
          %600 = vmatprep.subr.bf16.mxu0 0
          %601 = vmatpush1.bf16.msra.mxu0 0
          %602 = vmatprep.subr.bf16.mxu0 0
          %603 = vmatpush1.bf16.msra.mxu0 0
          %604 = vmatprep.subr.bf16.mxu0 0
          %605 = vmatpush1.bf16.msra.mxu0 0
          %606 = vmatprep.subr.bf16.mxu0 0
          %607 = vmatpush1.bf16.msra.mxu0 0
          %608 = vmatprep.subr.bf16.mxu0 0
          %609 = vmatpush1.bf16.msra.mxu0 0
          %610 = vmatprep.subr.bf16.mxu0 0
          %611 = vmatpush1.bf16.msra.mxu0 0
          %612 = vmatprep.mubr.bf16.mxu0 0
          %613 = vmatmul.mubr.bf16.gmra.mrb[0].mxu0 %v508
          %v614 = vpop.f32.mrb[0].mxu0
          %v615 = vadd.f32 0.0, %v614
          %v616 = vpop.f32.mrb[0].mxu0
          %v617 = vpop.f32.mrb[0].mxu0
          %v618 = vadd.f32 0.0, %v617
          %v619 = vpop.f32.mrb[0].mxu0
          %620 = vmatprep.mubr.bf16.mxu0 0
          %621 = vmatmul.mubr.bf16.gmra.mrb[0].mxu0 %v509
          %v622 = vpop.f32.mrb[0].mxu0
          %v623 = vadd.f32 0.0, %v622
          %v624 = vpop.f32.mrb[0].mxu0
          %v625 = vpop.f32.mrb[0].mxu0
          %v626 = vadd.f32 0.0, %v625
          %v627 = vpop.f32.mrb[0].mxu0
          %628 = vmatprep.mubr.bf16.mxu0 0
          %629 = vmatmul.mubr.bf16.gmra.mrb[0].mxu0 %v510
          %v630 = vpop.f32.mrb[0].mxu0
          %v631 = vadd.f32 0.0, %v630
          %v632 = vpop.f32.mrb[0].mxu0
          %v633 = vpop.f32.mrb[0].mxu0
          %v634 = vadd.f32 0.0, %v633
          %v635 = vpop.f32.mrb[0].mxu0
          %636 = vmatprep.mubr.bf16.mxu0 0
          %637 = vmatmul.mubr.bf16.gmra.mrb[0].mxu0 %v511
          %v638 = vpop.f32.mrb[0].mxu0
          %v639 = vadd.f32 0.0, %v638
          %v640 = vpop.f32.mrb[0].mxu0
          %v641 = vpop.f32.mrb[0].mxu0
          %v642 = vadd.f32 0.0, %v641
          %v643 = vpop.f32.mrb[0].mxu0
          %644 = vmatprep.mubr.bf16.mxu0 0
          %645 = vmatmul.mubr.bf16.gmra.mrb[0].mxu0 %v512
          %v646 = vpop.f32.mrb[0].mxu0
          %v647 = vadd.f32 0.0, %v646
          %v648 = vpop.f32.mrb[0].mxu0
          %v649 = vpop.f32.mrb[0].mxu0
          %v650 = vadd.f32 0.0, %v649
          %v651 = vpop.f32.mrb[0].mxu0
          %652 = vmatprep.mubr.bf16.mxu0 0
          %653 = vmatmul.mubr.bf16.gmra.mrb[0].mxu0 %v513
          %v654 = vpop.f32.mrb[0].mxu0
          %v655 = vadd.f32 0.0, %v654
          %v656 = vpop.f32.mrb[0].mxu0
          %v657 = vpop.f32.mrb[0].mxu0
          %v658 = vadd.f32 0.0, %v657
          %v659 = vpop.f32.mrb[0].mxu0
          %660 = vmatprep.mubr.bf16.mxu0 0
          %661 = vmatmul.mubr.bf16.gmra.mrb[0].mxu0 %v514
          %v662 = vpop.f32.mrb[0].mxu0
          %v663 = vadd.f32 0.0, %v662
          %v664 = vpop.f32.mrb[0].mxu0
          %v665 = vpop.f32.mrb[0].mxu0
          %v666 = vadd.f32 0.0, %v665
          %v667 = vpop.f32.mrb[0].mxu0
          %668 = vmatprep.mubr.bf16.mxu0 0
          %669 = vmatmul.mubr.bf16.gmra.mrb[0].mxu0 %v515
          %v670 = vpop.f32.mrb[0].mxu0
          %v671 = vadd.f32 0.0, %v670
          %v672 = vpop.f32.mrb[0].mxu0
          %v673 = vpop.f32.mrb[0].mxu0
          %v674 = vadd.f32 0.0, %v673
          %v675 = vpop.f32.mrb[0].mxu0
          %676 = vdwg.mxu0
          %v677 = vpack.c.bf16 %v618, %v615
          %v678 = vpack.c.bf16 %v626, %v623
          %v679 = vpack.c.bf16 %v634, %v631
          %v680 = vpack.c.bf16 %v642, %v639
          %v681 = vpack.c.bf16 %v650, %v647
          %v682 = vpack.c.bf16 %v658, %v655
          %v683 = vpack.c.bf16 %v666, %v663
          %v684 = vpack.c.bf16 %v674, %v671
          %s685 = sshra.s32 %s251, 4
          %s686 = sand.u32 %s251, 15
          %s687 = smul.addr %s685, 8
          %s688 = scalar_lea.vmem [#allocation2], %s687
          %689 = vst [vmem:[%s688] sm:$0xff] %v677
          %690 = vst [vmem:[%s688 + $0x8] sm:$0xff] %v678
          %691 = vst [vmem:[%s688 + $0x10] sm:$0xff] %v679
          %692 = vst [vmem:[%s688 + $0x18] sm:$0xff] %v680
          %693 = vst [vmem:[%s688 + $0x20] sm:$0xff] %v681
          %694 = vst [vmem:[%s688 + $0x28] sm:$0xff] %v682
          %695 = vst [vmem:[%s688 + $0x30] sm:$0xff] %v683
          %696 = vst [vmem:[%s688 + $0x38] sm:$0xff] %v684
        $region52: #{tpu_custom_call.1} parent=35 // pred_fallthru
          _
        %p697 = scmp.eq.s32.totalorder %s24, 1
        // Predicated region
        $region53: #{tpu_custom_call.1} parent=35 // pred_check
          %p698 = pneg %p697
        $region54: #{tpu_custom_call.1} parent=35 // pred_check_branch
          %700 = sbr.rel (%p698) target = $region56
        $region55: #{tpu_custom_call.1} parent=35 // pred_region
          %v701 = vld [vmem:[#allocation2] sm:$0xff]
          %v702 = vld [vmem:[#allocation2 + $0x8] sm:$0xff]
          %v703 = vld [vmem:[#allocation2 + $0x10] sm:$0xff]
          %v704 = vld [vmem:[#allocation2 + $0x18] sm:$0xff]
          %v705 = vld [vmem:[#allocation2 + $0x20] sm:$0xff]
          %v706 = vld [vmem:[#allocation2 + $0x28] sm:$0xff]
          %v707 = vld [vmem:[#allocation2 + $0x30] sm:$0xff]
          %v708 = vld [vmem:[#allocation2 + $0x38] sm:$0xff]
          %v710 = vlaneseq
          %v711 = vshrl.u32 %v710, 7
          %v712 = vsub.s32 0, %v711
          %v713 = vrot.slane %v272, %v712
          %v731 = vunpack.c.l.b16 %v256
          %v732 = vunpack.c.l.b16 %v257
          %v733 = vunpack.c.l.b16 %v258
          %v734 = vunpack.c.l.b16 %v259
          %v735 = vunpack.c.l.b16 %v260
          %v736 = vunpack.c.l.b16 %v261
          %v737 = vunpack.c.l.b16 %v262
          %v738 = vunpack.c.l.b16 %v263
          %v739 = vunpack.c.l.b16 %v264
          %v740 = vunpack.c.l.b16 %v265
          %v741 = vunpack.c.l.b16 %v266
          %v742 = vunpack.c.l.b16 %v267
          %v743 = vunpack.c.l.b16 %v268
          %v744 = vunpack.c.l.b16 %v269
          %v745 = vunpack.c.l.b16 %v270
          %v746 = vunpack.c.l.b16 %v271
          %v747 = vpack.c.b16 %v732, %v731
          %v748 = vpack.c.b16 %v734, %v733
          %v749 = vpack.c.b16 %v736, %v735
          %v750 = vpack.c.b16 %v738, %v737
          %v751 = vpack.c.b16 %v740, %v739
          %v752 = vpack.c.b16 %v742, %v741
          %v753 = vpack.c.b16 %v744, %v743
          %v754 = vpack.c.b16 %v746, %v745
          %763 = vmatprep.subr.bf16.mxu0 0
          %764 = vmatpush1.bf16.msra.mxu0 %v701
          %765 = vmatprep.subr.bf16.mxu0 0
          %766 = vmatpush1.bf16.msra.mxu0 %v702
          %767 = vmatprep.subr.bf16.mxu0 0
          %768 = vmatpush1.bf16.msra.mxu0 %v703
          %769 = vmatprep.subr.bf16.mxu0 0
          %770 = vmatpush1.bf16.msra.mxu0 %v704
          %771 = vmatprep.subr.bf16.mxu0 0
          %772 = vmatpush1.bf16.msra.mxu0 %v705
          %773 = vmatprep.subr.bf16.mxu0 0
          %774 = vmatpush1.bf16.msra.mxu0 %v706
          %775 = vmatprep.subr.bf16.mxu0 0
          %776 = vmatpush1.bf16.msra.mxu0 %v707
          %777 = vmatprep.subr.bf16.mxu0 0
          %778 = vmatpush1.bf16.msra.mxu0 %v708
          %779 = vmatprep.subr.bf16.mxu0 0
          %780 = vmatpush1.bf16.msra.mxu0 0
          %781 = vmatprep.subr.bf16.mxu0 0
          %782 = vmatpush1.bf16.msra.mxu0 0
          %783 = vmatprep.subr.bf16.mxu0 0
          %784 = vmatpush1.bf16.msra.mxu0 0
          %785 = vmatprep.subr.bf16.mxu0 0
          %786 = vmatpush1.bf16.msra.mxu0 0
          %787 = vmatprep.subr.bf16.mxu0 0
          %788 = vmatpush1.bf16.msra.mxu0 0
          %789 = vmatprep.subr.bf16.mxu0 0
          %790 = vmatpush1.bf16.msra.mxu0 0
          %791 = vmatprep.subr.bf16.mxu0 0
          %792 = vmatpush1.bf16.msra.mxu0 0
          %793 = vmatprep.subr.bf16.mxu0 0
          %794 = vmatpush1.bf16.msra.mxu0 0
          %795 = vmatprep.mubr.bf16.mxu0 0
          %796 = vmatmul.mubr.bf16.gmra.mrb[0].mxu0 %v747
          %v797 = vpop.f32.mrb[0].mxu0
          %v798 = vadd.f32 %v713, %v797
          %v799 = vpop.f32.mrb[0].mxu0
          %v800 = vpop.f32.mrb[0].mxu0
          %v801 = vadd.f32 %v713, %v800
          %v802 = vpop.f32.mrb[0].mxu0
          %803 = vmatprep.mubr.bf16.mxu0 0
          %804 = vmatmul.mubr.bf16.gmra.mrb[0].mxu0 %v748
          %v805 = vpop.f32.mrb[0].mxu0
          %v806 = vadd.f32 %v713, %v805
          %v807 = vpop.f32.mrb[0].mxu0
          %v808 = vpop.f32.mrb[0].mxu0
          %v809 = vadd.f32 %v713, %v808
          %v810 = vpop.f32.mrb[0].mxu0
          %811 = vmatprep.mubr.bf16.mxu0 0
          %812 = vmatmul.mubr.bf16.gmra.mrb[0].mxu0 %v749
          %v813 = vpop.f32.mrb[0].mxu0
          %v814 = vadd.f32 %v713, %v813
          %v815 = vpop.f32.mrb[0].mxu0
          %v816 = vpop.f32.mrb[0].mxu0
          %v817 = vadd.f32 %v713, %v816
          %v818 = vpop.f32.mrb[0].mxu0
          %819 = vmatprep.mubr.bf16.mxu0 0
          %820 = vmatmul.mubr.bf16.gmra.mrb[0].mxu0 %v750
          %v821 = vpop.f32.mrb[0].mxu0
          %v822 = vadd.f32 %v713, %v821
          %v823 = vpop.f32.mrb[0].mxu0
          %v824 = vpop.f32.mrb[0].mxu0
          %v825 = vadd.f32 %v713, %v824
          %v826 = vpop.f32.mrb[0].mxu0
          %827 = vmatprep.mubr.bf16.mxu0 0
          %828 = vmatmul.mubr.bf16.gmra.mrb[0].mxu0 %v751
          %v829 = vpop.f32.mrb[0].mxu0
          %v830 = vadd.f32 %v713, %v829
          %v831 = vpop.f32.mrb[0].mxu0
          %v832 = vpop.f32.mrb[0].mxu0
          %v833 = vadd.f32 %v713, %v832
          %v834 = vpop.f32.mrb[0].mxu0
          %835 = vmatprep.mubr.bf16.mxu0 0
          %836 = vmatmul.mubr.bf16.gmra.mrb[0].mxu0 %v752
          %v837 = vpop.f32.mrb[0].mxu0
          %v838 = vadd.f32 %v713, %v837
          %v839 = vpop.f32.mrb[0].mxu0
          %v840 = vpop.f32.mrb[0].mxu0
          %v841 = vadd.f32 %v713, %v840
          %v842 = vpop.f32.mrb[0].mxu0
          %843 = vmatprep.mubr.bf16.mxu0 0
          %844 = vmatmul.mubr.bf16.gmra.mrb[0].mxu0 %v753
          %v845 = vpop.f32.mrb[0].mxu0
          %v846 = vadd.f32 %v713, %v845
          %v847 = vpop.f32.mrb[0].mxu0
          %v848 = vpop.f32.mrb[0].mxu0
          %v849 = vadd.f32 %v713, %v848
          %v850 = vpop.f32.mrb[0].mxu0
          %851 = vmatprep.mubr.bf16.mxu0 0
          %852 = vmatmul.mubr.bf16.gmra.mrb[0].mxu0 %v754
          %v853 = vpop.f32.mrb[0].mxu0
          %v854 = vadd.f32 %v713, %v853
          %v855 = vpop.f32.mrb[0].mxu0
          %v856 = vpop.f32.mrb[0].mxu0
          %v857 = vadd.f32 %v713, %v856
          %v858 = vpop.f32.mrb[0].mxu0
          %859 = vdwg.mxu0
          %v860 = vmax.f32 %v798, 0.0
          %v861 = vmax.f32 %v801, 0.0
          %v862 = vmax.f32 %v806, 0.0
          %v863 = vmax.f32 %v809, 0.0
          %v864 = vmax.f32 %v814, 0.0
          %v865 = vmax.f32 %v817, 0.0
          %v866 = vmax.f32 %v822, 0.0
          %v867 = vmax.f32 %v825, 0.0
          %v868 = vmax.f32 %v830, 0.0
          %v869 = vmax.f32 %v833, 0.0
          %v870 = vmax.f32 %v838, 0.0
          %v871 = vmax.f32 %v841, 0.0
          %v872 = vmax.f32 %v846, 0.0
          %v873 = vmax.f32 %v849, 0.0
          %v874 = vmax.f32 %v854, 0.0
          %v875 = vmax.f32 %v857, 0.0
          %876 = vst [vmem:[%s244] sm:$0xff] %v860
          %877 = vst [vmem:[%s244 + $0x8] sm:$0xff] %v861
          %878 = vst [vmem:[%s244 + $0x10] sm:$0xff] %v862
          %879 = vst [vmem:[%s244 + $0x18] sm:$0xff] %v863
          %880 = vst [vmem:[%s244 + $0x20] sm:$0xff] %v864
          %881 = vst [vmem:[%s244 + $0x28] sm:$0xff] %v865
          %882 = vst [vmem:[%s244 + $0x30] sm:$0xff] %v866
          %883 = vst [vmem:[%s244 + $0x38] sm:$0xff] %v867
          %884 = vst [vmem:[%s244 + $0x40] sm:$0xff] %v868
          %885 = vst [vmem:[%s244 + $0x48] sm:$0xff] %v869
          %886 = vst [vmem:[%s244 + $0x50] sm:$0xff] %v870
          %887 = vst [vmem:[%s244 + $0x58] sm:$0xff] %v871
          %888 = vst [vmem:[%s244 + $0x60] sm:$0xff] %v872
          %889 = vst [vmem:[%s244 + $0x68] sm:$0xff] %v873
          %890 = vst [vmem:[%s244 + $0x70] sm:$0xff] %v874
          %891 = vst [vmem:[%s244 + $0x78] sm:$0xff] %v875
        $region56: #{tpu_custom_call.1} parent=35 // pred_fallthru
          _
        %s892 = sand.u32 %s131, 1
        %s893 = scalar_lea.sflag [#allocation5], %s892
        %s894 = sand.u32 %s131, 1
        %s895 = smul.addr %s894, 128
        %s896 = scalar_lea.vmem [#allocation9], %s895
        // Predicated region
        $region57: #{tpu_custom_call.1} parent=35 // pred_check
          %p897 = pneg %p141
        $region58: #{tpu_custom_call.1} parent=35 // pred_check_branch
          %899 = sbr.rel (%p897) target = $region60
        $region59: #{tpu_custom_call.1} parent=35 // pred_region
          %s900 = smul.u32 %s24, %s25
          %s901 = smul.u32 16, %s900
          %s903 = ssub.s32 2048, 2048
          %904 = vsyncadd %s893, %s903
          %s905 = smul.addr %s901, 128
          %s906 = scalar_lea.hbm %s4, %s905
          %s907 = sshll.u32 %s896, 4
          %s908 = int_to_ptr.vmem [resolvable:$true] %s907
          %913 = dma.vmem_to_hbm [thread:$0]  %s908, 2048, %s906, %s893, 128, 128, 8
        $region60: #{tpu_custom_call.1} parent=35 // pred_fallthru
          _
      $region36: #{tpu_custom_call.1} parent=5 // pred_fallthru
        _
      %p914 = scmp.le.s32.totalorder 2, %s15
      // Predicated region
      $region61: #{tpu_custom_call.1} parent=5 // pred_check
        %p915 = pneg %p914
      $region62: #{tpu_custom_call.1} parent=5 // pred_check_branch
        %917 = sbr.rel (%p915) target = $region64
      $region63: #{tpu_custom_call.1} parent=5 // pred_region
        %s918 = ssub.s32 %s15, 2
        // Predicated region
        $region65: #{tpu_custom_call.1} parent=63 // pred_check
          %p919 = pneg %p147
        $region66: #{tpu_custom_call.1} parent=63 // pred_check_branch
          %921 = sbr.rel (%p919) target = $region68
        $region67: #{tpu_custom_call.1} parent=63 // pred_region
          %s922 = sand.u32 %s132, 1
          %s923 = scalar_lea.sflag [#allocation5], %s922
          %s924 = sand.u32 %s132, 1
          %s925 = smul.addr %s924, 128
          %s926 = scalar_lea.vmem [#allocation9], %s925
          %927 = dma.done %s923, 2048
        $region68: #{tpu_custom_call.1} parent=63 // pred_fallthru
          _
      $region64: #{tpu_custom_call.1} parent=5 // pred_fallthru
        _
    $region6: #{tpu_custom_call.1} parent=1 // loop_footer
      %s19 = sadd.s32 1, %s15
    $region7: #{tpu_custom_call.1} parent=1 // loop_footer_branch
      %14 = sbr.rel target = $region3
    $region8: #{tpu_custom_call.1} parent=1 // loop_exit
      _
    %928 = vsyncpa [#allocation4], 1
    %s929 = scalar_lea.sflag [#allocation4], 1
    %930 = vsyncpa %s929, 1
    %931 = vsyncpa [#allocation7], 1
    %932 = vsyncpa [#allocation5], 1
    %s933 = scalar_lea.sflag [#allocation5], 1
    %934 = vsyncpa %s933, 1

</llo_original>
